<compile_context>
chip_gen: v7x
topology: tpu7x:2x2x1
jax: 0.10.0
libtpu: 0.0.40
codegen_flags: <defaults>
</compile_context>

<pallas_src>
import functools

import jax
import jax.numpy as jnp
from jax.experimental import pallas as pl
from jax.experimental.pallas import tpu as pltpu

EPS = 1e-5


def _round_up(x, m):
    return ((x + m - 1) // m) * m


def fc_bn_relu_kernel(x_ref, w_ref, gamma_ref, beta_ref, o_ref, acc_ref, *, inv_n, eps):
    k = pl.program_id(1)

    @pl.when(k == 0)
    def _():
        acc_ref[...] = jnp.zeros_like(acc_ref)

    # K-chunk of the Linear layer on the MXU, f32 accumulate.
    acc_ref[...] += jnp.dot(x_ref[...], w_ref[...], preferred_element_type=jnp.float32)

    @pl.when(k == pl.num_programs(1) - 1)
    def _():
        y = acc_ref[...]                                   # (N_pad, TILE_N) f32
        # One reduction pass for both moments; 1/n applied on the (1, TILE_N) rows only.
        s1 = jnp.sum(y, axis=0, keepdims=True)
        s2 = jnp.sum(y * y, axis=0, keepdims=True)
        mean = s1 * inv_n
        var = jnp.maximum(s2 * inv_n - mean * mean, 0.0)   # clamp: avoid NaN from cancellation
        scale = gamma_ref[...] * jax.lax.rsqrt(var + eps)  # rsqrt -> EUP (free slot)
        shift = beta_ref[...] - mean * scale
        # Single fused scale/shift + ReLU pass over the tile.
        o_ref[...] = jnp.maximum(y * scale + shift, 0.0).astype(o_ref.dtype)


def fc_layer(x, w, b, gamma, beta, *, tile_n=None, tile_k=None, eps=EPS):
    """x: (N, in_ch) f32; w: (in_ch, out_ch); b/gamma/beta: (1, out_ch). Returns (N, out_ch) f32.

    `b` is accepted for API parity with nn.Linear but is not used inside the kernel: the bias
    cancels exactly through train-mode BatchNorm (verified against the reference below).
    """
    del b  # mathematically a no-op through train-mode BN
    N, in_ch = x.shape
    out_ch = w.shape[1]

    # Pad to lane/sublane-friendly sizes (zero padding keeps BN stats exact, see header).
    n_pad = _round_up(N, 8)
    in_pad = _round_up(in_ch, 128)
    out_pad = _round_up(out_ch, 128)

    if tile_k is None:
        tile_k = 256 if in_pad % 256 == 0 else 128
    if tile_n is None:
        tile_n = 256 if out_pad % 256 == 0 else 128
    tile_k = min(tile_k, in_pad)
    tile_n = min(tile_n, out_pad)

    x_p = jnp.zeros((n_pad, in_pad), jnp.float32).at[:N, :in_ch].set(x.astype(jnp.float32))
    w_p = jnp.zeros((in_pad, out_pad), jnp.float32).at[:in_ch, :out_ch].set(w.astype(jnp.float32))
    gamma_p = jnp.zeros((1, out_pad), jnp.float32).at[:, :out_ch].set(gamma.astype(jnp.float32))
    beta_p = jnp.zeros((1, out_pad), jnp.float32).at[:, :out_ch].set(beta.astype(jnp.float32))

    grid = (out_pad // tile_n, in_pad // tile_k)   # (parallel out_ch tiles, K reduction last)

    kernel = functools.partial(fc_bn_relu_kernel, inv_n=1.0 / float(N), eps=eps)

    out_p = pl.pallas_call(
        kernel,
        out_shape=jax.ShapeDtypeStruct((n_pad, out_pad), jnp.float32),
        grid_spec=pltpu.PrefetchScalarGridSpec(
            num_scalar_prefetch=0,
            grid=grid,
            in_specs=[
                # x: full batch, K-chunked; constant over the out_ch axis (no re-fetch per j).
                pl.BlockSpec((n_pad, tile_k), lambda j, k: (0, k)),
                # w: (K-chunk, out_ch-tile)
                pl.BlockSpec((tile_k, tile_n), lambda j, k: (k, j)),
                # gamma/beta: per out_ch tile, constant over K (fetched once per j).
                pl.BlockSpec((1, tile_n), lambda j, k: (0, j)),
                pl.BlockSpec((1, tile_n), lambda j, k: (0, j)),
            ],
            # Output block constant over K -> resident across the reduction, written once per j.
            out_specs=pl.BlockSpec((n_pad, tile_n), lambda j, k: (0, j)),
            scratch_shapes=[pltpu.VMEM((n_pad, tile_n), jnp.float32)],
        ),
        compiler_params=pltpu.CompilerParams(
            dimension_semantics=("parallel", "arbitrary"),
            vmem_limit_bytes=64 * 1024 * 1024,
        ),
    )(x_p, w_p, gamma_p, beta_p)

    return out_p[:N, :out_ch]


def fc_layer_ref(x, w, b, gamma, beta):
    # Exact PyTorch forward semantics: Linear (with bias) -> BatchNorm1d (train, biased var) -> ReLU.
    y = x @ w + b
    mean = jnp.mean(y, axis=0, keepdims=True)
    var = jnp.mean((y - mean) ** 2, axis=0, keepdims=True)
    y_hat = (y - mean) * jax.lax.rsqrt(var + EPS)
    return jnp.maximum(y_hat * gamma + beta, 0.0)


if __name__ == "__main__":
    key = jax.random.PRNGKey(0)
    k_x, k_w, k_b = jax.random.split(key, 3)

    N, in_ch, out_ch = 16, 32, 64

    x = jax.random.normal(k_x, (N, in_ch), dtype=jnp.float32)

    # nn.Linear default init (uniform +/- 1/sqrt(in_ch)); BatchNorm1d defaults gamma=1, beta=0.
    bound = 1.0 / (in_ch ** 0.5)
    w = jax.random.uniform(k_w, (in_ch, out_ch), minval=-bound, maxval=bound, dtype=jnp.float32)
    b = jax.random.uniform(k_b, (1, out_ch), minval=-bound, maxval=bound, dtype=jnp.float32)
    gamma = jnp.ones((1, out_ch), dtype=jnp.float32)
    beta = jnp.zeros((1, out_ch), dtype=jnp.float32)

    out = fc_layer(x, w, b, gamma, beta)
    out = jax.block_until_ready(out)

    ref = fc_layer_ref(x, w, b, gamma, beta)
    assert out.shape == (N, out_ch)
    assert jnp.allclose(out, ref, atol=1e-4, rtol=1e-4), "mismatch vs reference"

    print("KERNEL_OK")
</pallas_src>

<mosaic_0001>
module attributes {stable_mosaic.version = 11 : i64} {
  func.func @fc_bn_relu_kernel(%arg0: i32, %arg1: i32, %arg2: memref<16x128xf32, #tpu.memory_space<vmem>>, %arg3: memref<128x128xf32, #tpu.memory_space<vmem>>, %arg4: memref<1x128xf32, #tpu.memory_space<vmem>>, %arg5: memref<1x128xf32, #tpu.memory_space<vmem>>, %arg6: memref<16x128xf32, #tpu.memory_space<vmem>>, %arg7: memref<16x128xf32, #tpu.memory_space<vmem>>) attributes {dimension_semantics = [#tpu.dimension_semantics<parallel>, #tpu.dimension_semantics<arbitrary>], iteration_bounds = array<i64: 1, 1>, scalar_prefetch = 0 : i64, scratch_operands = 1 : i64, tpu.core_type = #tpu.core_type<tc>, window_params = [{transform_indices = @transform_0, window_bounds = array<i64: 16, 128>}, {transform_indices = @transform_1, window_bounds = array<i64: 128, 128>}, {transform_indices = @transform_2, window_bounds = array<i64: 1, 128>}, {transform_indices = @transform_3, window_bounds = array<i64: 1, 128>}, {transform_indices = @transform_4, window_bounds = array<i64: 16, 128>}]} {
    %c0_i32 = arith.constant 0 : i32
    %0 = arith.cmpi eq, %arg1, %c0_i32 : i32
    %1 = arith.extui %0 : i1 to i32
    %c0_i32_0 = arith.constant 0 : i32
    %2 = arith.cmpi ne, %1, %c0_i32_0 : i32
    scf.if %2 {
      %cst_10 = arith.constant 0.000000e+00 : f32
      %12 = vector.broadcast %cst_10 : f32 to vector<16x128xf32>
      %c0_11 = arith.constant 0 : index
      %c0_12 = arith.constant 0 : index
      %13 = vector.load %arg7[%c0_11, %c0_12] : memref<16x128xf32, #tpu.memory_space<vmem>>, vector<16x128xf32>
      tpu.vector_store %arg7[%c0_11, %c0_12], %12 {strides = array<i32>} : memref<16x128xf32, #tpu.memory_space<vmem>>, vector<16x128xf32>,
    } else {
    }
    %c0 = arith.constant 0 : index
    %c0_1 = arith.constant 0 : index
    %3 = vector.load %arg7[%c0, %c0_1] : memref<16x128xf32, #tpu.memory_space<vmem>>, vector<16x128xf32>
    %c0_2 = arith.constant 0 : index
    %c0_3 = arith.constant 0 : index
    %4 = vector.load %arg2[%c0_2, %c0_3] : memref<16x128xf32, #tpu.memory_space<vmem>>, vector<16x128xf32>
    %c0_4 = arith.constant 0 : index
    %c0_5 = arith.constant 0 : index
    %5 = vector.load %arg3[%c0_4, %c0_5] : memref<128x128xf32, #tpu.memory_space<vmem>>, vector<128x128xf32>
    %cst = arith.constant dense<0.000000e+00> : vector<16x128xf32>
    %6 = tpu.matmul %4, %5, %cst {dimension_numbers = #tpu.dot_dimension_numbers<[1], [0], [0], [1], [0, 0, 1, 1], [], []>} : vector<16x128xf32>, vector<128x128xf32>, vector<16x128xf32> -> vector<16x128xf32>
    %7 = arith.addf %3, %6 : vector<16x128xf32>
    %c0_6 = arith.constant 0 : index
    %c0_7 = arith.constant 0 : index
    %8 = vector.load %arg7[%c0_6, %c0_7] : memref<16x128xf32, #tpu.memory_space<vmem>>, vector<16x128xf32>
    tpu.vector_store %arg7[%c0_6, %c0_7], %7 {strides = array<i32>} : memref<16x128xf32, #tpu.memory_space<vmem>>, vector<16x128xf32>,
    %c0_i32_8 = arith.constant 0 : i32
    %9 = arith.cmpi eq, %arg1, %c0_i32_8 : i32
    %10 = arith.extui %9 : i1 to i32
    %c0_i32_9 = arith.constant 0 : i32
    %11 = arith.cmpi ne, %10, %c0_i32_9 : i32
    scf.if %11 {
      %c0_10 = arith.constant 0 : index
      %c0_11 = arith.constant 0 : index
      %12 = vector.load %arg7[%c0_10, %c0_11] : memref<16x128xf32, #tpu.memory_space<vmem>>, vector<16x128xf32>
      %cst_12 = arith.constant dense<0.000000e+00> : vector<128xf32>
      %13 = vector.multi_reduction <add>, %12, %cst_12 [0] : vector<16x128xf32> to vector<128xf32>
      %14 = vector.shape_cast %13 : vector<128xf32> to vector<1x128xf32>
      %15 = arith.mulf %12, %12 : vector<16x128xf32>
      %cst_13 = arith.constant dense<0.000000e+00> : vector<128xf32>
      %16 = vector.multi_reduction <add>, %15, %cst_13 [0] : vector<16x128xf32> to vector<128xf32>
      %17 = vector.shape_cast %16 : vector<128xf32> to vector<1x128xf32>
      %cst_14 = arith.constant 6.250000e-02 : f32
      %18 = vector.broadcast %cst_14 : f32 to vector<1x128xf32>
      %19 = arith.mulf %14, %18 : vector<1x128xf32>
      %cst_15 = arith.constant 6.250000e-02 : f32
      %20 = vector.broadcast %cst_15 : f32 to vector<1x128xf32>
      %21 = arith.mulf %17, %20 : vector<1x128xf32>
      %22 = arith.mulf %19, %19 : vector<1x128xf32>
      %23 = arith.subf %21, %22 : vector<1x128xf32>
      %cst_16 = arith.constant 0.000000e+00 : f32
      %24 = vector.broadcast %cst_16 : f32 to vector<1x128xf32>
      %25 = arith.maximumf %23, %24 : vector<1x128xf32>
      %c0_17 = arith.constant 0 : index
      %c0_18 = arith.constant 0 : index
      %26 = vector.load %arg4[%c0_17, %c0_18] : memref<1x128xf32, #tpu.memory_space<vmem>>, vector<1x128xf32>
      %cst_19 = arith.constant 9.99999974E-6 : f32
      %27 = vector.broadcast %cst_19 : f32 to vector<1x128xf32>
      %28 = arith.addf %25, %27 : vector<1x128xf32>
      %29 = math.rsqrt %28 : vector<1x128xf32>
      %30 = arith.mulf %26, %29 : vector<1x128xf32>
      %c0_20 = arith.constant 0 : index
      %c0_21 = arith.constant 0 : index
      %31 = vector.load %arg5[%c0_20, %c0_21] : memref<1x128xf32, #tpu.memory_space<vmem>>, vector<1x128xf32>
      %32 = arith.mulf %19, %30 : vector<1x128xf32>
      %33 = arith.subf %31, %32 : vector<1x128xf32>
      %34 = vector.broadcast %30 : vector<1x128xf32> to vector<16x128xf32>
      %35 = arith.mulf %12, %34 : vector<16x128xf32>
      %36 = vector.broadcast %33 : vector<1x128xf32> to vector<16x128xf32>
      %37 = arith.addf %35, %36 : vector<16x128xf32>
      %cst_22 = arith.constant 0.000000e+00 : f32
      %38 = vector.broadcast %cst_22 : f32 to vector<16x128xf32>
      %39 = arith.maximumf %37, %38 : vector<16x128xf32>
      %c0_23 = arith.constant 0 : index
      %c0_24 = arith.constant 0 : index
      %40 = vector.load %arg6[%c0_23, %c0_24] : memref<16x128xf32, #tpu.memory_space<vmem>>, vector<16x128xf32>
      tpu.vector_store %arg6[%c0_23, %c0_24], %39 {strides = array<i32>} : memref<16x128xf32, #tpu.memory_space<vmem>>, vector<16x128xf32>,
    } else {
    }
    return
  }
  func.func @transform_0(%arg0: i32, %arg1: i32) -> (i32, i32) {
    %c0_i32 = arith.constant 0 : i32
    %c0_i32_0 = arith.constant 0 : i32
    return %c0_i32, %arg1 : i32, i32
  }
  func.func @transform_1(%arg0: i32, %arg1: i32) -> (i32, i32) {
    %c0_i32 = arith.constant 0 : i32
    return %arg1, %arg0 : i32, i32
  }
  func.func @transform_2(%arg0: i32, %arg1: i32) -> (i32, i32) {
    %c0_i32 = arith.constant 0 : i32
    %c0_i32_0 = arith.constant 0 : i32
    return %c0_i32, %arg0 : i32, i32
  }
  func.func @transform_3(%arg0: i32, %arg1: i32) -> (i32, i32) {
    %c0_i32 = arith.constant 0 : i32
    %c0_i32_0 = arith.constant 0 : i32
    return %c0_i32, %arg0 : i32, i32
  }
  func.func @transform_4(%arg0: i32, %arg1: i32) -> (i32, i32) {
    %c0_i32 = arith.constant 0 : i32
    %c0_i32_0 = arith.constant 0 : i32
    return %c0_i32, %arg0 : i32, i32
  }
}

</mosaic_0001>

<llo_original>
// kernel: tpu_custom_call.1
$region0: #{tpu_custom_call.1}
  #allocation0 [shape = 'u32[]', space=smem, size = 0x4, offset = 0x4, fixed_abs, tag = 'smem constant byte address 0x4 - core index']
  #allocation1 [shape = 'u32[144,128]{1,0:T(1,128)}', space=vmem, size = 0x12000, scoped, tag = 'internal scratch']
  #allocation2 [shape = 'f32[16,128]{1,0:T(8,128)}', space=vmem, size = 0x2000, scoped, tag = 'scratch operand']
  %s0 = inlined_call_operand.hbm [shape: f32[16,128], index: 0, kind: input, shape index: {}]
  %s1 = inlined_call_operand.hbm [shape: f32[128,128], index: 1, kind: input, shape index: {}]
  %s2 = inlined_call_operand.hbm [shape: f32[1,128], index: 2, kind: input, shape index: {}]
  %s3 = inlined_call_operand.hbm [shape: f32[1,128], index: 3, kind: input, shape index: {}]
  %s4 = inlined_call_operand.hbm [shape: f32[16,128], index: 4, kind: output, shape index: {}]
  %s5 = sld [smem:[#allocation0]]
  $region50: #{tpu_custom_call.1} parent=0
    _
  %s7 = ssub.s32 1, %s5
  %s8 = scalar_select 0, %s7, %s5
  $region1: #{tpu_custom_call.1} parent=0
    #allocation3 [shape = 'u8[8192]{0}', space=vmem, size = 0x2000, scoped, tag = 'input window, operand 0, single buffered']
    #allocation4 [shape = 's32[1]{0}', space=sflag, size = 0x4, scoped, tag = 'scoped memory for tpu_custom_call.1']
    #allocation5 [shape = 's32[1]{0}', space=sflag, size = 0x4, scoped, tag = 'scoped memory for tpu_custom_call.1']
    #allocation6 [shape = 'u8[65536]{0}', space=vmem, size = 0x10000, scoped, tag = 'input window, operand 1, single buffered']
    #allocation7 [shape = 's32[1]{0}', space=sflag, size = 0x4, scoped, tag = 'scoped memory for tpu_custom_call.1']
    #allocation8 [shape = 'u8[512]{0}', space=vmem, size = 0x400, scoped, tag = 'input window, operand 2, single buffered']
    #allocation9 [shape = 'u8[512]{0}', space=vmem, size = 0x400, scoped, tag = 'input window, operand 3, single buffered']
    #allocation10 [shape = 's32[1]{0}', space=sflag, size = 0x4, scoped, tag = 'scoped memory for tpu_custom_call.1']
    #allocation11 [shape = 'u8[8192]{0}', space=vmem, size = 0x2000, scoped, tag = 'output window, operand 0, single buffered']
    %9 = vsyncpa [#allocation4], 0
    %10 = vsyncpa [#allocation7], 0
    %11 = vsyncpa [#allocation10], 0
    %12 = vsyncpa [#allocation5], 0
    // Predicated region
    $region2: #{tpu_custom_call.1} parent=1 // pred_check
      _
    $region3: #{tpu_custom_call.1} parent=1 // pred_check_branch
      %14 = sbr.rel (0) target = $region5
    $region4: #{tpu_custom_call.1} parent=1 // pred_region
      %s16 = ssub.s32 256, 256
      %17 = vsyncadd [#allocation4], %s16
      %s18 = sshll.u32 [#allocation3], 4
      %s19 = int_to_ptr.vmem [resolvable:$true] %s18
      %24 = dma.hbm_to_vmem [thread:$0]  %s0, 256, %s19, [#allocation4], 128, 128, 8
    $region5: #{tpu_custom_call.1} parent=1 // pred_fallthru
      _
    // Predicated region
    $region6: #{tpu_custom_call.1} parent=1 // pred_check
      _
    $region7: #{tpu_custom_call.1} parent=1 // pred_check_branch
      %26 = sbr.rel (0) target = $region9
    $region8: #{tpu_custom_call.1} parent=1 // pred_region
      %s28 = ssub.s32 2048, 2048
      %29 = vsyncadd [#allocation7], %s28
      %s30 = sshll.u32 [#allocation6], 4
      %s31 = int_to_ptr.vmem [resolvable:$true] %s30
      %36 = dma.hbm_to_vmem [thread:$0]  %s1, 2048, %s31, [#allocation7], 128, 128, 8
    $region9: #{tpu_custom_call.1} parent=1 // pred_fallthru
      _
    // Predicated region
    $region10: #{tpu_custom_call.1} parent=1 // pred_check
      _
    $region11: #{tpu_custom_call.1} parent=1 // pred_check_branch
      %38 = sbr.rel (0) target = $region13
    $region12: #{tpu_custom_call.1} parent=1 // pred_region
      %s40 = ssub.s32 16, 16
      %41 = vsyncadd [#allocation7], %s40
      %s43 = sshll.u32 [#allocation8], 4
      %s44 = int_to_ptr.vmem [resolvable:$true] %s43
      %46 = dma.hbm_to_vmem [thread:$0]  %s2, 16, %s44, [#allocation7]
    $region13: #{tpu_custom_call.1} parent=1 // pred_fallthru
      _
    // Predicated region
    $region14: #{tpu_custom_call.1} parent=1 // pred_check
      _
    $region15: #{tpu_custom_call.1} parent=1 // pred_check_branch
      %48 = sbr.rel (0) target = $region17
    $region16: #{tpu_custom_call.1} parent=1 // pred_region
      %s50 = ssub.s32 16, 16
      %51 = vsyncadd [#allocation10], %s50
      %s53 = sshll.u32 [#allocation9], 4
      %s54 = int_to_ptr.vmem [resolvable:$true] %s53
      %56 = dma.hbm_to_vmem [thread:$0]  %s3, 16, %s54, [#allocation10]
    $region17: #{tpu_custom_call.1} parent=1 // pred_fallthru
      _
    // Predicated region
    $region18: #{tpu_custom_call.1} parent=1 // pred_check
      _
    $region19: #{tpu_custom_call.1} parent=1 // pred_check_branch
      %58 = sbr.rel (0) target = $region21
    $region20: #{tpu_custom_call.1} parent=1 // pred_region
      %59 = dma.done [#allocation4], 256
    $region21: #{tpu_custom_call.1} parent=1 // pred_fallthru
      _
    // Predicated region
    $region22: #{tpu_custom_call.1} parent=1 // pred_check
      _
    $region23: #{tpu_custom_call.1} parent=1 // pred_check_branch
      %61 = sbr.rel (0) target = $region25
    $region24: #{tpu_custom_call.1} parent=1 // pred_region
      %62 = dma.done [#allocation7], 2048
    $region25: #{tpu_custom_call.1} parent=1 // pred_fallthru
      _
    // Predicated region
    $region26: #{tpu_custom_call.1} parent=1 // pred_check
      _
    $region27: #{tpu_custom_call.1} parent=1 // pred_check_branch
      %64 = sbr.rel (0) target = $region29
    $region28: #{tpu_custom_call.1} parent=1 // pred_region
      %65 = dma.done [#allocation7], 16
    $region29: #{tpu_custom_call.1} parent=1 // pred_fallthru
      _
    // Predicated region
    $region30: #{tpu_custom_call.1} parent=1 // pred_check
      _
    $region31: #{tpu_custom_call.1} parent=1 // pred_check_branch
      %67 = sbr.rel (0) target = $region33
    $region32: #{tpu_custom_call.1} parent=1 // pred_region
      %68 = dma.done [#allocation10], 16
    $region33: #{tpu_custom_call.1} parent=1 // pred_fallthru
      _
    %p69 = scmp.eq.s32.totalorder 0, 0
    // Predicated region
    $region34: #{tpu_custom_call.1} parent=1 // pred_check
      %p70 = pneg %p69
    $region35: #{tpu_custom_call.1} parent=1 // pred_check_branch
      %72 = sbr.rel (%p70) target = $region37
    $region36: #{tpu_custom_call.1} parent=1 // pred_region
      %73 = vst [vmem:[#allocation2] sm:$0xff] 0.0
      %74 = vst [vmem:[#allocation2 + $0x8] sm:$0xff] 0.0
    $region37: #{tpu_custom_call.1} parent=1 // pred_fallthru
      _
    %v75 = vld [vmem:[#allocation2] sm:$0xff]
    %v76 = vld [vmem:[#allocation2 + $0x8] sm:$0xff]
    %v77 = vld [vmem:[#allocation3] sm:$0xff]
    %v78 = vld [vmem:[#allocation3 + $0x8] sm:$0xff]
    %v79 = vld [vmem:[#allocation6] sm:$0xff]
    %v80 = vld [vmem:[#allocation6 + $0x8] sm:$0xff]
    %v81 = vld [vmem:[#allocation6 + $0x10] sm:$0xff]
    %v82 = vld [vmem:[#allocation6 + $0x18] sm:$0xff]
    %v83 = vld [vmem:[#allocation6 + $0x20] sm:$0xff]
    %v84 = vld [vmem:[#allocation6 + $0x28] sm:$0xff]
    %v85 = vld [vmem:[#allocation6 + $0x30] sm:$0xff]
    %v86 = vld [vmem:[#allocation6 + $0x38] sm:$0xff]
    %v87 = vld [vmem:[#allocation6 + $0x40] sm:$0xff]
    %v88 = vld [vmem:[#allocation6 + $0x48] sm:$0xff]
    %v89 = vld [vmem:[#allocation6 + $0x50] sm:$0xff]
    %v90 = vld [vmem:[#allocation6 + $0x58] sm:$0xff]
    %v91 = vld [vmem:[#allocation6 + $0x60] sm:$0xff]
    %v92 = vld [vmem:[#allocation6 + $0x68] sm:$0xff]
    %v93 = vld [vmem:[#allocation6 + $0x70] sm:$0xff]
    %v94 = vld [vmem:[#allocation6 + $0x78] sm:$0xff]
    %95 = vmatprep.subr.mxu0 0.0
    %96 = vmatpush1.msra.mxu0 %v79
    %97 = vmatprep.subr.mxu0 0.0
    %98 = vmatpush1.msra.mxu0 %v80
    %99 = vmatprep.subr.mxu0 0.0
    %100 = vmatpush1.msra.mxu0 %v81
    %101 = vmatprep.subr.mxu0 0.0
    %102 = vmatpush1.msra.mxu0 %v82
    %103 = vmatprep.subr.mxu0 0.0
    %104 = vmatpush1.msra.mxu0 %v83
    %105 = vmatprep.subr.mxu0 0.0
    %106 = vmatpush1.msra.mxu0 %v84
    %107 = vmatprep.subr.mxu0 0.0
    %108 = vmatpush1.msra.mxu0 %v85
    %109 = vmatprep.subr.mxu0 0.0
    %110 = vmatpush1.msra.mxu0 %v86
    %111 = vmatprep.subr.mxu0 0.0
    %112 = vmatpush1.msra.mxu0 %v87
    %113 = vmatprep.subr.mxu0 0.0
    %114 = vmatpush1.msra.mxu0 %v88
    %115 = vmatprep.subr.mxu0 0.0
    %116 = vmatpush1.msra.mxu0 %v89
    %117 = vmatprep.subr.mxu0 0.0
    %118 = vmatpush1.msra.mxu0 %v90
    %119 = vmatprep.subr.mxu0 0.0
    %120 = vmatpush1.msra.mxu0 %v91
    %121 = vmatprep.subr.mxu0 0.0
    %122 = vmatpush1.msra.mxu0 %v92
    %123 = vmatprep.subr.mxu0 0.0
    %124 = vmatpush1.msra.mxu0 %v93
    %125 = vmatprep.subr.mxu0 0.0
    %126 = vmatpush1.msra.mxu0 %v94
    %127 = vmatprep.subr.mxu0 0.0
    %128 = vmatpush1.msra.mxu0 0.0
    %129 = vmatprep.subr.mxu0 0.0
    %130 = vmatpush1.msra.mxu0 0.0
    %131 = vmatprep.subr.mxu0 0.0
    %132 = vmatpush1.msra.mxu0 0.0
    %133 = vmatprep.subr.mxu0 0.0
    %134 = vmatpush1.msra.mxu0 0.0
    %135 = vmatprep.subr.mxu0 0.0
    %136 = vmatpush1.msra.mxu0 0.0
    %137 = vmatprep.subr.mxu0 0.0
    %138 = vmatpush1.msra.mxu0 0.0
    %139 = vmatprep.subr.mxu0 0.0
    %140 = vmatpush1.msra.mxu0 0.0
    %141 = vmatprep.subr.mxu0 0.0
    %142 = vmatpush1.msra.mxu0 0.0
    %143 = vmatprep.subr.mxu0 0.0
    %144 = vmatpush1.msra.mxu0 0.0
    %145 = vmatprep.subr.mxu0 0.0
    %146 = vmatpush1.msra.mxu0 0.0
    %147 = vmatprep.subr.mxu0 0.0
    %148 = vmatpush1.msra.mxu0 0.0
    %149 = vmatprep.subr.mxu0 0.0
    %150 = vmatpush1.msra.mxu0 0.0
    %151 = vmatprep.subr.mxu0 0.0
    %152 = vmatpush1.msra.mxu0 0.0
    %153 = vmatprep.subr.mxu0 0.0
    %154 = vmatpush1.msra.mxu0 0.0
    %155 = vmatprep.subr.mxu0 0.0
    %156 = vmatpush1.msra.mxu0 0.0
    %157 = vmatprep.subr.mxu0 0.0
    %158 = vmatpush1.msra.mxu0 0.0
    %159 = vmatprep.mubr.f32.mxu0 0.0
    %160 = vmatmul.mubr.f32.gmra.mrb[0].mxu0 %v77
    %v161 = vpop.f32.mrb[0].mxu0
    %v162 = vadd.f32 0.0, %v161
    %v163 = vpop.f32.mrb[0].mxu0
    %164 = vmatprep.mubr.f32.mxu0 0.0
    %165 = vmatmul.mubr.f32.gmra.mrb[0].mxu0 %v78
    %v166 = vpop.f32.mrb[0].mxu0
    %v167 = vadd.f32 0.0, %v166
    %v168 = vpop.f32.mrb[0].mxu0
    %169 = vdwg.mxu0
    %v170 = vadd.f32 %v75, %v162
    %v171 = vadd.f32 %v76, %v167
    %172 = vst [vmem:[#allocation2] sm:$0xff] %v170
    %173 = vst [vmem:[#allocation2 + $0x8] sm:$0xff] %v171
    // Predicated region
    $region38: #{tpu_custom_call.1} parent=1 // pred_check
      %p174 = pneg %p69
    $region39: #{tpu_custom_call.1} parent=1 // pred_check_branch
      %176 = sbr.rel (%p174) target = $region41
    $region40: #{tpu_custom_call.1} parent=1 // pred_region
      %v177 = vld [vmem:[#allocation2] sm:$0xff]
      %v178 = vld [vmem:[#allocation2 + $0x8] sm:$0xff]
      %v179 = vadd.f32 %v177, %v178
      %v180 = vrot.slane %v179, 4
      %v181 = vadd.f32 %v179, %v180
      %v182 = vrot.slane %v181, 2
      %v183 = vadd.f32 %v181, %v182
      %v184 = vrot.slane %v183, 1
      %v185 = vadd.f32 %v183, %v184
      %v186 = vmul.f32 %v177, %v177
      %v187 = vmul.f32 %v178, %v178
      %v188 = vadd.f32 %v186, %v187
      %v189 = vrot.slane %v188, 4
      %v190 = vadd.f32 %v188, %v189
      %v191 = vrot.slane %v190, 2
      %v192 = vadd.f32 %v190, %v191
      %v193 = vrot.slane %v192, 1
      %v194 = vadd.f32 %v192, %v193
      %v195 = vmul.f32 %v185, 0.0625
      %v196 = vmul.f32 %v194, 0.0625
      %v197 = vmul.f32 %v195, %v195
      %v198 = vsub.f32 %v196, %v197
      %v199 = vmax.f32 %v198, 0.0
      %v200 = vld [vmem:[#allocation8] sm:$0x1]
      %v201 = vadd.f32 %v199, 1e-05
      %v202 = vrsqrt.pop %v201
      %v203 = vmul.f32 %v200, %v202
      %v204 = vld [vmem:[#allocation9] sm:$0x1]
      %v205 = vmul.f32 %v195, %v203
      %v206 = vsub.f32 %v204, %v205
      %v208 = vlaneseq
      %v209 = vshrl.u32 %v208, 7
      %v210 = vsub.s32 0, %v209
      %v211 = vrot.slane %v203, %v210
      %v213 = vmul.f32 %v177, %v211
      %v214 = vmul.f32 %v178, %v211
      %v216 = vlaneseq
      %v217 = vshrl.u32 %v216, 7
      %v218 = vsub.s32 0, %v217
      %v219 = vrot.slane %v206, %v218
      %v221 = vadd.f32 %v213, %v219
      %v222 = vadd.f32 %v214, %v219
      %v223 = vmax.f32 %v221, 0.0
      %v224 = vmax.f32 %v222, 0.0
      %225 = vst [vmem:[#allocation11] sm:$0xff] %v223
      %226 = vst [vmem:[#allocation11 + $0x8] sm:$0xff] %v224
    $region41: #{tpu_custom_call.1} parent=1 // pred_fallthru
      _
    // Predicated region
    $region42: #{tpu_custom_call.1} parent=1 // pred_check
      _
    $region43: #{tpu_custom_call.1} parent=1 // pred_check_branch
      %228 = sbr.rel (0) target = $region45
    $region44: #{tpu_custom_call.1} parent=1 // pred_region
      %s230 = ssub.s32 256, 256
      %231 = vsyncadd [#allocation5], %s230
      %s232 = sshll.u32 [#allocation11], 4
      %s233 = int_to_ptr.vmem [resolvable:$true] %s232
      %238 = dma.vmem_to_hbm [thread:$0]  %s233, 256, %s4, [#allocation5], 128, 128, 8
    $region45: #{tpu_custom_call.1} parent=1 // pred_fallthru
      _
    // Predicated region
    $region46: #{tpu_custom_call.1} parent=1 // pred_check
      _
    $region47: #{tpu_custom_call.1} parent=1 // pred_check_branch
      %240 = sbr.rel (0) target = $region49
    $region48: #{tpu_custom_call.1} parent=1 // pred_region
      %241 = dma.done [#allocation5], 256
    $region49: #{tpu_custom_call.1} parent=1 // pred_fallthru
      _
    %242 = vsyncpa [#allocation4], 1
    %243 = vsyncpa [#allocation7], 1
    %244 = vsyncpa [#allocation10], 1
    %245 = vsyncpa [#allocation5], 1

</llo_original>
